<compile_context>
chip_gen: v7x
topology: tpu7x:2x2x1
jax: 0.10.0
libtpu: 0.0.40
codegen_flags: <defaults>
</compile_context>

<pallas_src>
import jax
import jax.numpy as jnp
from jax.experimental import pallas as pl
from jax.experimental.pallas import tpu as pltpu

# Constants from IS2RECriterion.
E_MEAN = -1.4729953244844094
E_STD = 2.2707848125378405
D_MEAN = [0.1353900283575058, 0.06877671927213669, 0.08111362904310226]
D_STD = [1.7862379550933838, 1.78688645362854, 0.8023099899291992]

INV_E_STD = 1.0 / E_STD
INV_D_STD = [1.0 / s for s in D_STD]
INV_3 = 1.0 / 3.0

# Lane-dense node tile (multiple of 128).  When N <= TILE_N a single full-N
# tile is used (block == full dim, so no 128-divisibility requirement).
# Per-step working set (2 f32 tensors + bf16 mask, double-buffered) stays far
# below the scoped-VMEM defaults on v5e (16 MiB), v6e (32 MiB) and v7x.
TILE_N = 16384


def _make_kernel(node_w):
    """Build the criterion kernel with node_loss_weight baked in as a constant.

    NOTE: if num_updates (and hence node_w) changes every training step under
    jit, pass node_w as an SMEM scalar instead to avoid retracing.
    """
    node_w = float(node_w)

    def kernel(ep_ref, et_ref, no_ref, dp_ref, m_ref, out_ref, sum_sc, cnt_sc):
        k = pl.program_id(1)                       # node-tile (reduction) axis

        @pl.when(k == 0)
        def _init():
            sum_sc[...] = jnp.zeros_like(sum_sc)
            cnt_sc[...] = jnp.zeros_like(cnt_sc)

        no = no_ref[0].astype(jnp.float32)         # (3, tile_n)
        dp = dp_ref[0].astype(jnp.float32)         # (3, tile_n)
        mask = m_ref[0].astype(jnp.float32)        # (1, tile_n)

        # Static Python loop over the 3 xyz channels with scalar constants:
        #   (dp - mean) / std  ==  dp * (1/std) - mean * (1/std)
        absdiff = None
        for c in range(3):
            dp_c = dp[c:c + 1, :] * INV_D_STD[c] - (D_MEAN[c] * INV_D_STD[c])
            diff = jnp.abs(no[c:c + 1, :] - dp_c)
            absdiff = diff if absdiff is None else absdiff + diff

        # Mask is exactly 0/1 -> apply once after the abs-diff.
        masked = absdiff * mask                                   # (1, tile_n)
        sum_sc[...] += jnp.sum(masked, axis=1, keepdims=True)     # (1, 1)
        cnt_sc[...] += jnp.sum(mask, axis=1, keepdims=True)       # (1, 1)

        @pl.when(k == pl.num_programs(1) - 1)
        def _finalize():
            ep = ep_ref[0].astype(jnp.float32)                    # (1, 1)
            et = et_ref[0].astype(jnp.float32)                    # (1, 1)
            e_loss = jnp.abs(ep - (et - E_MEAN) * INV_E_STD)      # (1, 1)
            # A graph with zero target nodes gives cnt==0 -> inf/NaN, same
            # hazard as the PyTorch original.  Zero-padded node columns have
            # mask==0 and cannot reduce cnt (it is accumulated over all tiles
            # of the graph before this divide).
            node_loss = sum_sc[...] * (INV_3 * node_w) / cnt_sc[...]
            out_ref[0] = e_loss + node_loss

    return kernel


def is2re_criterion(output, relaxed_energy, node_output_bdn, deltapos,
                    node_target_mask, num_updates, node_loss_weight=1.0,
                    min_node_loss_weight=0.0, max_update=100000):
    """Pallas implementation of IS2RECriterion.forward (given model outputs).

    Args:
      output:            (B,)       energy prediction from the model.
      relaxed_energy:    (B,)       energy target.
      node_output_bdn:   (B, 3, N)  deltapos prediction, lane-dense layout.
      deltapos:          (B, N, 3)  deltapos target (dataset layout).
      node_target_mask:  (B, N, 1)  0/1 mask (any float/int dtype, e.g. bf16).
      num_updates:       Python int.
    """
    assert num_updates >= 0
    nlw_range = max(0.0, node_loss_weight - min_node_loss_weight)
    w = node_loss_weight - nlw_range * num_updates / max_update

    B, c3, N = node_output_bdn.shape
    assert c3 == 3

    # Tiny per-graph energy scalars as (B,1,1) f32 blocks.
    ep = output.astype(jnp.float32).reshape(B, 1, 1)
    et = relaxed_energy.astype(jnp.float32).reshape(B, 1, 1)

    # Lane-dense relayout of the targets (dataset ships (B,N,3)/(B,N,1)).
    dp_bdn = jnp.transpose(deltapos, (0, 2, 1))        # (B, 3, N)
    mask_b1n = node_target_mask.reshape(B, 1, N)       # (B, 1, N), native dtype

    # Tile the node axis; zero-pad (padding is masked out and does not alter
    # the per-graph count).
    if N <= TILE_N:
        tile_n, n_pad = N, N
    else:
        tile_n = TILE_N
        n_pad = pl.cdiv(N, tile_n) * tile_n
    if n_pad != N:
        pad = ((0, 0), (0, 0), (0, n_pad - N))
        node_output_bdn = jnp.pad(node_output_bdn, pad)
        dp_bdn = jnp.pad(dp_bdn, pad)
        mask_b1n = jnp.pad(mask_b1n, pad)
    n_tiles = n_pad // tile_n

    grid_spec = pltpu.PrefetchScalarGridSpec(
        num_scalar_prefetch=0,
        grid=(B, n_tiles),
        in_specs=[
            pl.BlockSpec((1, 1, 1), lambda b, k: (b, 0, 0)),        # energy pred
            pl.BlockSpec((1, 1, 1), lambda b, k: (b, 0, 0)),        # energy tgt
            pl.BlockSpec((1, 3, tile_n), lambda b, k: (b, 0, k)),   # node_output
            pl.BlockSpec((1, 3, tile_n), lambda b, k: (b, 0, k)),   # deltapos
            pl.BlockSpec((1, 1, tile_n), lambda b, k: (b, 0, k)),   # mask
        ],
        out_specs=pl.BlockSpec((1, 1, 1), lambda b, k: (b, 0, 0)),
        scratch_shapes=[pltpu.VMEM((1, 1), jnp.float32),   # per-graph abs-sum
                        pltpu.VMEM((1, 1), jnp.float32)],  # per-graph cnt
    )

    per_graph = pl.pallas_call(
        _make_kernel(w),
        out_shape=jax.ShapeDtypeStruct((B, 1, 1), jnp.float32),
        grid_spec=grid_spec,
        compiler_params=pltpu.CompilerParams(
            dimension_semantics=("parallel", "arbitrary")),
    )(ep, et, node_output_bdn, dp_bdn, mask_b1n)

    # Per-graph partial losses (each already includes its energy L1 term and
    # the weighted node term) -> total loss.
    return jnp.sum(per_graph)


def synthetic_model(x, mask, w_e, w_n):
    """Plain-JAX stand-in for the external `model` callable in the criterion.

    The node head emits 'bdn' (B, 3, N) directly so the criterion gets a
    lane-dense layout without an extra transpose.
    """
    output = jnp.einsum("bnh,h->b", x, w_e) / x.shape[1]        # (B,) energy head
    node_output_bdn = jnp.einsum("bnh,hd->bdn", x, w_n)         # (B, 3, N)
    return output, node_output_bdn, mask


def reference_criterion(output, relaxed_energy, node_output, deltapos, mask,
                        num_updates, node_loss_weight=1.0,
                        min_node_loss_weight=0.0, max_update=100000):
    """Pure-JAX reference mirroring the PyTorch forward (node_output (B,N,3))."""
    nlw_range = max(0.0, node_loss_weight - min_node_loss_weight)
    w = node_loss_weight - nlw_range * num_updates / max_update
    e = (relaxed_energy.astype(jnp.float32) - E_MEAN) / E_STD
    loss = jnp.sum(jnp.abs(output.astype(jnp.float32).reshape(-1) - e))
    dm = jnp.array(D_MEAN, jnp.float32)
    ds = jnp.array(D_STD, jnp.float32)
    dp = (deltapos.astype(jnp.float32) - dm) / ds
    dp = dp * mask
    no = node_output.astype(jnp.float32) * mask
    cnt = jnp.sum(mask, axis=(1, 2))
    node_loss = jnp.sum(
        jnp.sum(jnp.mean(jnp.abs(no - dp), axis=-1), axis=-1) / cnt)
    return loss + w * node_loss


if __name__ == "__main__":
    B, N, H = 2, 8, 16
    key = jax.random.PRNGKey(0)
    k1, k2, k3, k4, k5 = jax.random.split(key, 5)

    # Deterministic synthetic "model" parameters.
    w_e = jax.random.normal(k1, (H,), dtype=jnp.float32)
    w_n = jax.random.normal(k2, (H, 3), dtype=jnp.float32) * 0.1

    # Deterministic synthetic sample.
    x = jax.random.normal(k3, (B, N, H), dtype=jnp.float32)          # net_input
    relaxed_energy = jax.random.normal(k4, (B,), dtype=jnp.float32)  # targets
    deltapos = jax.random.normal(k5, (B, N, 3), dtype=jnp.float32)   # targets
    # Mask shipped in a narrow dtype (bf16) straight from the data pipeline;
    # the kernel upcasts in-VMEM.  First 5 nodes of each graph are targets.
    node_target_mask = (jnp.arange(N)[None, :, None] < 5).astype(jnp.bfloat16)
    node_target_mask = jnp.broadcast_to(node_target_mask, (B, N, 1))

    num_updates = 12345

    output, node_output_bdn, mask = synthetic_model(x, node_target_mask, w_e, w_n)

    loss = is2re_criterion(output, relaxed_energy, node_output_bdn, deltapos,
                           mask, num_updates)
    loss = jax.block_until_ready(loss)

    ref = reference_criterion(output, relaxed_energy,
                              jnp.transpose(node_output_bdn, (0, 2, 1)),
                              deltapos, mask.astype(jnp.float32), num_updates)
    assert jnp.allclose(loss, ref, rtol=1e-5, atol=1e-5), (loss, ref)

    print("KERNEL_OK")
</pallas_src>

<mosaic_0001>
module attributes {stable_mosaic.version = 11 : i64} {
  func.func @kernel(%arg0: i32, %arg1: i32, %arg2: memref<1x1x1xf32, #tpu.memory_space<vmem>>, %arg3: memref<1x1x1xf32, #tpu.memory_space<vmem>>, %arg4: memref<1x3x8xf32, #tpu.memory_space<vmem>>, %arg5: memref<1x3x8xf32, #tpu.memory_space<vmem>>, %arg6: memref<1x1x8xbf16, #tpu.memory_space<vmem>>, %arg7: memref<1x1x1xf32, #tpu.memory_space<vmem>>, %arg8: memref<1x1xf32, #tpu.memory_space<vmem>>, %arg9: memref<1x1xf32, #tpu.memory_space<vmem>>) attributes {dimension_semantics = [#tpu.dimension_semantics<parallel>, #tpu.dimension_semantics<arbitrary>], iteration_bounds = array<i64: 2, 1>, scalar_prefetch = 0 : i64, scratch_operands = 2 : i64, tpu.core_type = #tpu.core_type<tc>, window_params = [{transform_indices = @transform_0, window_bounds = array<i64: 1, 1, 1>}, {transform_indices = @transform_1, window_bounds = array<i64: 1, 1, 1>}, {transform_indices = @transform_2, window_bounds = array<i64: 1, 3, 8>}, {transform_indices = @transform_3, window_bounds = array<i64: 1, 3, 8>}, {transform_indices = @transform_4, window_bounds = array<i64: 1, 1, 8>}, {transform_indices = @transform_5, window_bounds = array<i64: 1, 1, 1>}]} {
    %c0_i32 = arith.constant 0 : i32
    %0 = arith.cmpi eq, %arg1, %c0_i32 : i32
    %1 = arith.extui %0 : i1 to i32
    %c0_i32_0 = arith.constant 0 : i32
    %2 = arith.cmpi ne, %1, %c0_i32_0 : i32
    scf.if %2 {
      %cst_26 = arith.constant 0.000000e+00 : f32
      %50 = vector.broadcast %cst_26 : f32 to vector<1x1xf32>
      %c0_27 = arith.constant 0 : index
      %c0_28 = arith.constant 0 : index
      %51 = vector.load %arg8[%c0_27, %c0_28] : memref<1x1xf32, #tpu.memory_space<vmem>>, vector<1x1xf32>
      tpu.vector_store %arg8[%c0_27, %c0_28], %50 {strides = array<i32>} : memref<1x1xf32, #tpu.memory_space<vmem>>, vector<1x1xf32>,
      %cst_29 = arith.constant 0.000000e+00 : f32
      %52 = vector.broadcast %cst_29 : f32 to vector<1x1xf32>
      %c0_30 = arith.constant 0 : index
      %c0_31 = arith.constant 0 : index
      %53 = vector.load %arg9[%c0_30, %c0_31] : memref<1x1xf32, #tpu.memory_space<vmem>>, vector<1x1xf32>
      tpu.vector_store %arg9[%c0_30, %c0_31], %52 {strides = array<i32>} : memref<1x1xf32, #tpu.memory_space<vmem>>, vector<1x1xf32>,
    } else {
    }
    %c0 = arith.constant 0 : index
    %c0_1 = arith.constant 0 : index
    %c0_2 = arith.constant 0 : index
    %3 = vector.load %arg4[%c0, %c0_1, %c0_2] : memref<1x3x8xf32, #tpu.memory_space<vmem>>, vector<1x3x8xf32>
    %4 = vector.shape_cast %3 : vector<1x3x8xf32> to vector<3x8xf32>
    %c0_3 = arith.constant 0 : index
    %c0_4 = arith.constant 0 : index
    %c0_5 = arith.constant 0 : index
    %5 = vector.load %arg5[%c0_3, %c0_4, %c0_5] : memref<1x3x8xf32, #tpu.memory_space<vmem>>, vector<1x3x8xf32>
    %6 = vector.shape_cast %5 : vector<1x3x8xf32> to vector<3x8xf32>
    %c0_6 = arith.constant 0 : index
    %c0_7 = arith.constant 0 : index
    %c0_8 = arith.constant 0 : index
    %7 = vector.load %arg6[%c0_6, %c0_7, %c0_8] : memref<1x1x8xbf16, #tpu.memory_space<vmem>>, vector<1x1x8xbf16>
    %8 = vector.shape_cast %7 : vector<1x1x8xbf16> to vector<1x8xbf16>
    %9 = arith.extf %8 : vector<1x8xbf16> to vector<1x8xf32>
    %10 = vector.extract_strided_slice %6 {offsets = [0, 0], sizes = [1, 8], strides = [1, 1]} : vector<3x8xf32> to vector<1x8xf32>
    %cst = arith.constant 0.559835851 : f32
    %11 = vector.broadcast %cst : f32 to vector<1x8xf32>
    %12 = arith.mulf %10, %11 : vector<1x8xf32>
    %cst_9 = arith.constant 0.0757961869 : f32
    %13 = vector.broadcast %cst_9 : f32 to vector<1x8xf32>
    %14 = arith.subf %12, %13 : vector<1x8xf32>
    %15 = vector.extract_strided_slice %4 {offsets = [0, 0], sizes = [1, 8], strides = [1, 1]} : vector<3x8xf32> to vector<1x8xf32>
    %16 = arith.subf %15, %14 : vector<1x8xf32>
    %17 = math.absf %16 : vector<1x8xf32>
    %18 = vector.extract_strided_slice %6 {offsets = [1, 0], sizes = [1, 8], strides = [1, 1]} : vector<3x8xf32> to vector<1x8xf32>
    %cst_10 = arith.constant 0.559632659 : f32
    %19 = vector.broadcast %cst_10 : f32 to vector<1x8xf32>
    %20 = arith.mulf %18, %19 : vector<1x8xf32>
    %cst_11 = arith.constant 3.848970e-02 : f32
    %21 = vector.broadcast %cst_11 : f32 to vector<1x8xf32>
    %22 = arith.subf %20, %21 : vector<1x8xf32>
    %23 = vector.extract_strided_slice %4 {offsets = [1, 0], sizes = [1, 8], strides = [1, 1]} : vector<3x8xf32> to vector<1x8xf32>
    %24 = arith.subf %23, %22 : vector<1x8xf32>
    %25 = math.absf %24 : vector<1x8xf32>
    %26 = arith.addf %17, %25 : vector<1x8xf32>
    %27 = vector.extract_strided_slice %6 {offsets = [2, 0], sizes = [1, 8], strides = [1, 1]} : vector<3x8xf32> to vector<1x8xf32>
    %cst_12 = arith.constant 1.24640107 : f32
    %28 = vector.broadcast %cst_12 : f32 to vector<1x8xf32>
    %29 = arith.mulf %27, %28 : vector<1x8xf32>
    %cst_13 = arith.constant 0.10110011 : f32
    %30 = vector.broadcast %cst_13 : f32 to vector<1x8xf32>
    %31 = arith.subf %29, %30 : vector<1x8xf32>
    %32 = vector.extract_strided_slice %4 {offsets = [2, 0], sizes = [1, 8], strides = [1, 1]} : vector<3x8xf32> to vector<1x8xf32>
    %33 = arith.subf %32, %31 : vector<1x8xf32>
    %34 = math.absf %33 : vector<1x8xf32>
    %35 = arith.addf %26, %34 : vector<1x8xf32>
    %36 = arith.mulf %35, %9 : vector<1x8xf32>
    %c0_14 = arith.constant 0 : index
    %c0_15 = arith.constant 0 : index
    %37 = vector.load %arg8[%c0_14, %c0_15] : memref<1x1xf32, #tpu.memory_space<vmem>>, vector<1x1xf32>
    %cst_16 = arith.constant dense<0.000000e+00> : vector<1xf32>
    %38 = vector.multi_reduction <add>, %36, %cst_16 [1] : vector<1x8xf32> to vector<1xf32>
    %39 = vector.shape_cast %38 : vector<1xf32> to vector<1x1xf32>
    %40 = arith.addf %37, %39 : vector<1x1xf32>
    %c0_17 = arith.constant 0 : index
    %c0_18 = arith.constant 0 : index
    %41 = vector.load %arg8[%c0_17, %c0_18] : memref<1x1xf32, #tpu.memory_space<vmem>>, vector<1x1xf32>
    tpu.vector_store %arg8[%c0_17, %c0_18], %40 {strides = array<i32>} : memref<1x1xf32, #tpu.memory_space<vmem>>, vector<1x1xf32>,
    %c0_19 = arith.constant 0 : index
    %c0_20 = arith.constant 0 : index
    %42 = vector.load %arg9[%c0_19, %c0_20] : memref<1x1xf32, #tpu.memory_space<vmem>>, vector<1x1xf32>
    %cst_21 = arith.constant dense<0.000000e+00> : vector<1xf32>
    %43 = vector.multi_reduction <add>, %9, %cst_21 [1] : vector<1x8xf32> to vector<1xf32>
    %44 = vector.shape_cast %43 : vector<1xf32> to vector<1x1xf32>
    %45 = arith.addf %42, %44 : vector<1x1xf32>
    %c0_22 = arith.constant 0 : index
    %c0_23 = arith.constant 0 : index
    %46 = vector.load %arg9[%c0_22, %c0_23] : memref<1x1xf32, #tpu.memory_space<vmem>>, vector<1x1xf32>
    tpu.vector_store %arg9[%c0_22, %c0_23], %45 {strides = array<i32>} : memref<1x1xf32, #tpu.memory_space<vmem>>, vector<1x1xf32>,
    %c0_i32_24 = arith.constant 0 : i32
    %47 = arith.cmpi eq, %arg1, %c0_i32_24 : i32
    %48 = arith.extui %47 : i1 to i32
    %c0_i32_25 = arith.constant 0 : i32
    %49 = arith.cmpi ne, %48, %c0_i32_25 : i32
    scf.if %49 {
      %c0_26 = arith.constant 0 : index
      %c0_27 = arith.constant 0 : index
      %c0_28 = arith.constant 0 : index
      %50 = vector.load %arg2[%c0_26, %c0_27, %c0_28] : memref<1x1x1xf32, #tpu.memory_space<vmem>>, vector<1x1x1xf32>
      %51 = vector.shape_cast %50 : vector<1x1x1xf32> to vector<1x1xf32>
      %c0_29 = arith.constant 0 : index
      %c0_30 = arith.constant 0 : index
      %c0_31 = arith.constant 0 : index
      %52 = vector.load %arg3[%c0_29, %c0_30, %c0_31] : memref<1x1x1xf32, #tpu.memory_space<vmem>>, vector<1x1x1xf32>
      %53 = vector.shape_cast %52 : vector<1x1x1xf32> to vector<1x1xf32>
      %cst_32 = arith.constant -1.47299528 : f32
      %54 = vector.broadcast %cst_32 : f32 to vector<1x1xf32>
      %55 = arith.subf %53, %54 : vector<1x1xf32>
      %cst_33 = arith.constant 0.440376371 : f32
      %56 = vector.broadcast %cst_33 : f32 to vector<1x1xf32>
      %57 = arith.mulf %55, %56 : vector<1x1xf32>
      %58 = arith.subf %51, %57 : vector<1x1xf32>
      %59 = math.absf %58 : vector<1x1xf32>
      %c0_34 = arith.constant 0 : index
      %c0_35 = arith.constant 0 : index
      %60 = vector.load %arg8[%c0_34, %c0_35] : memref<1x1xf32, #tpu.memory_space<vmem>>, vector<1x1xf32>
      %cst_36 = arith.constant 0.29218334 : f32
      %61 = vector.broadcast %cst_36 : f32 to vector<1x1xf32>
      %62 = arith.mulf %60, %61 : vector<1x1xf32>
      %c0_37 = arith.constant 0 : index
      %c0_38 = arith.constant 0 : index
      %63 = vector.load %arg9[%c0_37, %c0_38] : memref<1x1xf32, #tpu.memory_space<vmem>>, vector<1x1xf32>
      %64 = arith.divf %62, %63 : vector<1x1xf32>
      %65 = arith.addf %59, %64 : vector<1x1xf32>
      %c0_39 = arith.constant 0 : index
      %c0_40 = arith.constant 0 : index
      %c0_41 = arith.constant 0 : index
      %66 = vector.load %arg7[%c0_39, %c0_40, %c0_41] : memref<1x1x1xf32, #tpu.memory_space<vmem>>, vector<1x1x1xf32>
      %67 = vector.shape_cast %66 : vector<1x1x1xf32> to vector<1x1xf32>
      %68 = vector.shape_cast %65 : vector<1x1xf32> to vector<1x1x1xf32>
      tpu.vector_store %arg7[%c0_39, %c0_40, %c0_41], %68 {strides = array<i32>} : memref<1x1x1xf32, #tpu.memory_space<vmem>>, vector<1x1x1xf32>,
    } else {
    }
    return
  }
  func.func @transform_0(%arg0: i32, %arg1: i32) -> (i32, i32, i32) {
    %c0_i32 = arith.constant 0 : i32
    %c0_i32_0 = arith.constant 0 : i32
    %c0_i32_1 = arith.constant 0 : i32
    return %arg0, %c0_i32, %c0_i32_0 : i32, i32, i32
  }
  func.func @transform_1(%arg0: i32, %arg1: i32) -> (i32, i32, i32) {
    %c0_i32 = arith.constant 0 : i32
    %c0_i32_0 = arith.constant 0 : i32
    %c0_i32_1 = arith.constant 0 : i32
    return %arg0, %c0_i32, %c0_i32_0 : i32, i32, i32
  }
  func.func @transform_2(%arg0: i32, %arg1: i32) -> (i32, i32, i32) {
    %c0_i32 = arith.constant 0 : i32
    %c0_i32_0 = arith.constant 0 : i32
    return %arg0, %c0_i32, %arg1 : i32, i32, i32
  }
  func.func @transform_3(%arg0: i32, %arg1: i32) -> (i32, i32, i32) {
    %c0_i32 = arith.constant 0 : i32
    %c0_i32_0 = arith.constant 0 : i32
    return %arg0, %c0_i32, %arg1 : i32, i32, i32
  }
  func.func @transform_4(%arg0: i32, %arg1: i32) -> (i32, i32, i32) {
    %c0_i32 = arith.constant 0 : i32
    %c0_i32_0 = arith.constant 0 : i32
    return %arg0, %c0_i32, %arg1 : i32, i32, i32
  }
  func.func @transform_5(%arg0: i32, %arg1: i32) -> (i32, i32, i32) {
    %c0_i32 = arith.constant 0 : i32
    %c0_i32_0 = arith.constant 0 : i32
    %c0_i32_1 = arith.constant 0 : i32
    return %arg0, %c0_i32, %c0_i32_0 : i32, i32, i32
  }
}

</mosaic_0001>

<llo_original>
// kernel: tpu_custom_call.1
$region0: #{tpu_custom_call.1}
  #allocation0 [shape = 'u32[]', space=smem, size = 0x4, offset = 0x4, fixed_abs, tag = 'smem constant byte address 0x4 - core index']
  #allocation1 [shape = 'u32[144,128]{1,0:T(1,128)}', space=vmem, size = 0x12000, scoped, tag = 'internal scratch']
  #allocation2 [shape = 'f32[1,1]{1,0:T(1,128)}', space=vmem, size = 0x200, scoped, tag = 'scratch operand']
  #allocation3 [shape = 'f32[1,1]{1,0:T(1,128)}', space=vmem, size = 0x200, scoped, tag = 'scratch operand']
  %s0 = inlined_call_operand.vmem [shape: f32[2,1,1], index: 0, kind: input, shape index: {}]
  %s1 = inlined_call_operand.vmem [shape: f32[2,1,1], index: 1, kind: input, shape index: {}]
  %s2 = inlined_call_operand.vmem [shape: f32[2,3,8], index: 2, kind: input, shape index: {}]
  %s3 = inlined_call_operand.vmem [shape: f32[2,3,8], index: 3, kind: input, shape index: {}]
  %s4 = inlined_call_operand.vmem [shape: bf16[2,1,8], index: 4, kind: input, shape index: {}]
  %s5 = inlined_call_operand.vmem [shape: f32[2,1,1], index: 5, kind: output, shape index: {}]
  %s6 = sld [smem:[#allocation0]]
  $region61: #{tpu_custom_call.1} parent=0
    _
  %s8 = ssub.s32 1, %s6
  %s9 = scalar_select 0, %s8, %s6
  loop: start=0, step=1, limit=4
  $region2: #{tpu_custom_call.1} parent=0 // loop_pre_header
    _
  $region3: #{tpu_custom_call.1} parent=0 // loop_header
    %s11 = sphi 0, %s15
    %p12 = scmp.ge.s32.totalorder %s11, 4
    %s18 = sphi 0, %s30
    %s19 = sphi 0, %s26
    %s20 = sphi 0, %s18
    %s21 = sphi 0, %s19
    %s22 = sphi 0, %s20
    %s23 = sphi 0, %s21
    %s33 = sphi 0, %s35
    %s36 = sphi 0, %s33
    %s37 = sphi 0, %s36
    %s53 = sphi 0, %s37
    %s59 = sphi 0, %s61
    %s62 = sphi 0, %s59
    %s63 = sphi 0, %s62
    %s79 = sphi 0, %s63
    %s87 = sphi 0, %s89
    %s90 = sphi 0, %s87
    %s91 = sphi 0, %s90
    %s107 = sphi 0, %s91
    %s115 = sphi 0, %s117
    %s118 = sphi 0, %s115
    %s119 = sphi 0, %s118
    %s135 = sphi 0, %s119
    %s143 = sphi 0, %s145
    %s146 = sphi 0, %s143
    %s147 = sphi 0, %s146
    %s163 = sphi 0, %s147
    %s169 = sphi 0, %s171
    %s172 = sphi 0, %s169
    %s173 = sphi 0, %s172
    %s189 = sphi 0, %s173
  $region4: #{tpu_custom_call.1} parent=0 // loop_header_branch
    %14 = sbr.rel (%p12) target = $region8
  $region5: #{tpu_custom_call.1} parent=0 // loop_body
    %s16 = ssub.s32 %s11, 1
    %s17 = ssub.s32 %s11, 2
    %s24 = sadd.s32 1, %s19
    %p25 = scmp.ge.s32.totalorder %s24, 1
    %s26 = scalar_select %p25, 0, %s24
    %s27 = sadd.s32 1, %s18
    %s28 = scalar_select %p25, %s27, %s18
    %p29 = scmp.ge.s32.totalorder %s28, 2
    %s30 = scalar_select %p29, 0, %s28
    %s31 = ssub.s32 %s18, %s30
    %p32 = scmp.eq.s32.totalorder %s31, 0
    %s34 = sadd.s32 %s33, 1
    %s35 = scalar_select %p32, %s33, %s34
    %p38 = pneg %p32
    %p39 = scmp.eq.s32.totalorder %s11, 1
    %p40 = por %p38, %p39
    %p41 = scmp.ne.s32.totalorder %s33, %s36
    %p42 = scmp.eq.s32.totalorder %s11, 0
    %p43 = por %p41, %p42
    %p44 = scmp.ne.s32.totalorder %s33, %s36
    %p45 = scmp.eq.s32.totalorder %s16, 1
    %p46 = por %p44, %p45
    %p47 = scmp.ne.s32.totalorder %s36, %s37
    %p48 = scmp.eq.s32.totalorder %s16, 0
    %p49 = por %p47, %p48
    %p50 = scmp.ne.s32.totalorder %s36, %s37
    %p51 = scmp.eq.s32.totalorder %s17, 1
    %p52 = por %p50, %p51
    %p54 = scmp.ne.s32.totalorder %s37, %s53
    %p55 = scmp.eq.s32.totalorder %s17, 0
    %p56 = por %p54, %p55
    %s57 = ssub.s32 %s18, %s30
    %p58 = scmp.eq.s32.totalorder %s57, 0
    %s60 = sadd.s32 %s59, 1
    %s61 = scalar_select %p58, %s59, %s60
    %p64 = pneg %p58
    %p65 = scmp.eq.s32.totalorder %s11, 1
    %p66 = por %p64, %p65
    %p67 = scmp.ne.s32.totalorder %s59, %s62
    %p68 = scmp.eq.s32.totalorder %s11, 0
    %p69 = por %p67, %p68
    %p70 = scmp.ne.s32.totalorder %s59, %s62
    %p71 = scmp.eq.s32.totalorder %s16, 1
    %p72 = por %p70, %p71
    %p73 = scmp.ne.s32.totalorder %s62, %s63
    %p74 = scmp.eq.s32.totalorder %s16, 0
    %p75 = por %p73, %p74
    %p76 = scmp.ne.s32.totalorder %s62, %s63
    %p77 = scmp.eq.s32.totalorder %s17, 1
    %p78 = por %p76, %p77
    %p80 = scmp.ne.s32.totalorder %s63, %s79
    %p81 = scmp.eq.s32.totalorder %s17, 0
    %p82 = por %p80, %p81
    %s83 = ssub.s32 %s18, %s30
    %s84 = ssub.s32 %s19, %s26
    %s85 = sor.u32 %s83, %s84
    %p86 = scmp.eq.s32.totalorder %s85, 0
    %s88 = sadd.s32 %s87, 1
    %s89 = scalar_select %p86, %s87, %s88
    %p92 = pneg %p86
    %p93 = scmp.eq.s32.totalorder %s11, 1
    %p94 = por %p92, %p93
    %p95 = scmp.ne.s32.totalorder %s87, %s90
    %p96 = scmp.eq.s32.totalorder %s11, 0
    %p97 = por %p95, %p96
    %p98 = scmp.ne.s32.totalorder %s87, %s90
    %p99 = scmp.eq.s32.totalorder %s16, 1
    %p100 = por %p98, %p99
    %p101 = scmp.ne.s32.totalorder %s90, %s91
    %p102 = scmp.eq.s32.totalorder %s16, 0
    %p103 = por %p101, %p102
    %p104 = scmp.ne.s32.totalorder %s90, %s91
    %p105 = scmp.eq.s32.totalorder %s17, 1
    %p106 = por %p104, %p105
    %p108 = scmp.ne.s32.totalorder %s91, %s107
    %p109 = scmp.eq.s32.totalorder %s17, 0
    %p110 = por %p108, %p109
    %s111 = ssub.s32 %s18, %s30
    %s112 = ssub.s32 %s19, %s26
    %s113 = sor.u32 %s111, %s112
    %p114 = scmp.eq.s32.totalorder %s113, 0
    %s116 = sadd.s32 %s115, 1
    %s117 = scalar_select %p114, %s115, %s116
    %p120 = pneg %p114
    %p121 = scmp.eq.s32.totalorder %s11, 1
    %p122 = por %p120, %p121
    %p123 = scmp.ne.s32.totalorder %s115, %s118
    %p124 = scmp.eq.s32.totalorder %s11, 0
    %p125 = por %p123, %p124
    %p126 = scmp.ne.s32.totalorder %s115, %s118
    %p127 = scmp.eq.s32.totalorder %s16, 1
    %p128 = por %p126, %p127
    %p129 = scmp.ne.s32.totalorder %s118, %s119
    %p130 = scmp.eq.s32.totalorder %s16, 0
    %p131 = por %p129, %p130
    %p132 = scmp.ne.s32.totalorder %s118, %s119
    %p133 = scmp.eq.s32.totalorder %s17, 1
    %p134 = por %p132, %p133
    %p136 = scmp.ne.s32.totalorder %s119, %s135
    %p137 = scmp.eq.s32.totalorder %s17, 0
    %p138 = por %p136, %p137
    %s139 = ssub.s32 %s18, %s30
    %s140 = ssub.s32 %s19, %s26
    %s141 = sor.u32 %s139, %s140
    %p142 = scmp.eq.s32.totalorder %s141, 0
    %s144 = sadd.s32 %s143, 1
    %s145 = scalar_select %p142, %s143, %s144
    %p148 = pneg %p142
    %p149 = scmp.eq.s32.totalorder %s11, 1
    %p150 = por %p148, %p149
    %p151 = scmp.ne.s32.totalorder %s143, %s146
    %p152 = scmp.eq.s32.totalorder %s11, 0
    %p153 = por %p151, %p152
    %p154 = scmp.ne.s32.totalorder %s143, %s146
    %p155 = scmp.eq.s32.totalorder %s16, 1
    %p156 = por %p154, %p155
    %p157 = scmp.ne.s32.totalorder %s146, %s147
    %p158 = scmp.eq.s32.totalorder %s16, 0
    %p159 = por %p157, %p158
    %p160 = scmp.ne.s32.totalorder %s146, %s147
    %p161 = scmp.eq.s32.totalorder %s17, 1
    %p162 = por %p160, %p161
    %p164 = scmp.ne.s32.totalorder %s147, %s163
    %p165 = scmp.eq.s32.totalorder %s17, 0
    %p166 = por %p164, %p165
    %s167 = ssub.s32 %s18, %s30
    %p168 = scmp.eq.s32.totalorder %s167, 0
    %s170 = sadd.s32 %s169, 1
    %s171 = scalar_select %p168, %s169, %s170
    %p174 = pneg %p168
    %p175 = scmp.eq.s32.totalorder %s11, 1
    %p176 = por %p174, %p175
    %p177 = scmp.ne.s32.totalorder %s169, %s172
    %p178 = scmp.eq.s32.totalorder %s11, 0
    %p179 = por %p177, %p178
    %p180 = scmp.ne.s32.totalorder %s169, %s172
    %p181 = scmp.eq.s32.totalorder %s16, 1
    %p182 = por %p180, %p181
    %p183 = scmp.ne.s32.totalorder %s172, %s173
    %p184 = scmp.eq.s32.totalorder %s16, 0
    %p185 = por %p183, %p184
    %p186 = scmp.ne.s32.totalorder %s172, %s173
    %p187 = scmp.eq.s32.totalorder %s17, 1
    %p188 = por %p186, %p187
    %p190 = scmp.ne.s32.totalorder %s173, %s189
    %p191 = scmp.eq.s32.totalorder %s17, 0
    %p192 = por %p190, %p191
    %p193 = scmp.le.s32.totalorder 1, %s11
    %p194 = scmp.lt.s32.totalorder %s11, 3
    %p195 = pnand %p193, %p194
    %p196 = pneg %p195
    // Predicated region
    $region9: #{tpu_custom_call.1} parent=5 // pred_check
      _
    $region10: #{tpu_custom_call.1} parent=5 // pred_check_branch
      %198 = sbr.rel (%p195) target = $region12
    $region11: #{tpu_custom_call.1} parent=5 // pred_region
      %s199 = ssub.s32 %s11, 1
    $region12: #{tpu_custom_call.1} parent=5 // pred_fallthru
      _
    %p200 = scmp.lt.s32.totalorder %s11, 2
    // Predicated region
    $region13: #{tpu_custom_call.1} parent=5 // pred_check
      %p201 = pneg %p200
    $region14: #{tpu_custom_call.1} parent=5 // pred_check_branch
      %203 = sbr.rel (%p201) target = $region16
    $region15: #{tpu_custom_call.1} parent=5 // pred_region
      // Predicated region
      $region17: #{tpu_custom_call.1} parent=15 // pred_check
        %p204 = pneg %p43
      $region18: #{tpu_custom_call.1} parent=15 // pred_check_branch
        %206 = sbr.rel (%p204) target = $region20
      $region19: #{tpu_custom_call.1} parent=15 // pred_region
        %p207 = scmp.lt.s32.totalorder %s18, 1
        %s208 = scalar_select %p207, %s18, 1
        %s209 = scalar_lea.vmem %s0, %s208
      $region20: #{tpu_custom_call.1} parent=15 // pred_fallthru
        _
      // Predicated region
      $region21: #{tpu_custom_call.1} parent=15 // pred_check
        %p210 = pneg %p69
      $region22: #{tpu_custom_call.1} parent=15 // pred_check_branch
        %212 = sbr.rel (%p210) target = $region24
      $region23: #{tpu_custom_call.1} parent=15 // pred_region
        %p213 = scmp.lt.s32.totalorder %s18, 1
        %s214 = scalar_select %p213, %s18, 1
        %s215 = scalar_lea.vmem %s1, %s214
      $region24: #{tpu_custom_call.1} parent=15 // pred_fallthru
        _
      // Predicated region
      $region25: #{tpu_custom_call.1} parent=15 // pred_check
        %p216 = pneg %p97
      $region26: #{tpu_custom_call.1} parent=15 // pred_check_branch
        %218 = sbr.rel (%p216) target = $region28
      $region27: #{tpu_custom_call.1} parent=15 // pred_region
        %p219 = scmp.lt.s32.totalorder %s18, 1
        %s220 = scalar_select %p219, %s18, 1
        %p221 = scmp.lt.s32.totalorder %s19, 0
        %s222 = scalar_select %p221, %s19, 0
        %s223 = sadd.s32 %s222, %s220
        %s224 = smul.addr %s223, 4
        %s225 = scalar_lea.vmem %s2, %s224
      $region28: #{tpu_custom_call.1} parent=15 // pred_fallthru
        _
      // Predicated region
      $region29: #{tpu_custom_call.1} parent=15 // pred_check
        %p226 = pneg %p125
      $region30: #{tpu_custom_call.1} parent=15 // pred_check_branch
        %228 = sbr.rel (%p226) target = $region32
      $region31: #{tpu_custom_call.1} parent=15 // pred_region
        %p229 = scmp.lt.s32.totalorder %s18, 1
        %s230 = scalar_select %p229, %s18, 1
        %p231 = scmp.lt.s32.totalorder %s19, 0
        %s232 = scalar_select %p231, %s19, 0
        %s233 = sadd.s32 %s232, %s230
        %s234 = smul.addr %s233, 4
        %s235 = scalar_lea.vmem %s3, %s234
      $region32: #{tpu_custom_call.1} parent=15 // pred_fallthru
        _
      // Predicated region
      $region33: #{tpu_custom_call.1} parent=15 // pred_check
        %p236 = pneg %p153
      $region34: #{tpu_custom_call.1} parent=15 // pred_check_branch
        %238 = sbr.rel (%p236) target = $region36
      $region35: #{tpu_custom_call.1} parent=15 // pred_region
        %p239 = scmp.lt.s32.totalorder %s18, 1
        %s240 = scalar_select %p239, %s18, 1
        %p241 = scmp.lt.s32.totalorder %s19, 0
        %s242 = scalar_select %p241, %s19, 0
        %s243 = sadd.s32 %s242, %s240
        %s244 = scalar_lea.vmem %s4, %s243
      $region36: #{tpu_custom_call.1} parent=15 // pred_fallthru
        _
    $region16: #{tpu_custom_call.1} parent=5 // pred_fallthru
      _
    %p245 = scmp.le.s32.totalorder 1, %s11
    %p246 = scmp.lt.s32.totalorder %s11, 3
    %p247 = pnand %p245, %p246
    %p248 = pneg %p247
    // Predicated region
    $region37: #{tpu_custom_call.1} parent=5 // pred_check
      _
    $region38: #{tpu_custom_call.1} parent=5 // pred_check_branch
      %250 = sbr.rel (%p247) target = $region40
    $region39: #{tpu_custom_call.1} parent=5 // pred_region
      %s251 = ssub.s32 %s11, 1
      %p252 = scmp.lt.s32.totalorder %s20, 1
      %s253 = scalar_select %p252, %s20, 1
      %s254 = scalar_lea.vmem %s0, %s253
      %p255 = pneg %p49
      %p256 = pneg %p46
      %p257 = scmp.lt.s32.totalorder %s20, 1
      %s258 = scalar_select %p257, %s20, 1
      %s259 = scalar_lea.vmem %s1, %s258
      %p260 = pneg %p75
      %p261 = pneg %p72
      %p262 = scmp.lt.s32.totalorder %s20, 1
      %s263 = scalar_select %p262, %s20, 1
      %p264 = scmp.lt.s32.totalorder %s21, 0
      %s265 = scalar_select %p264, %s21, 0
      %s266 = sadd.s32 %s265, %s263
      %s267 = smul.addr %s266, 4
      %s268 = scalar_lea.vmem %s2, %s267
      %p269 = pneg %p103
      %p270 = pneg %p100
      %p271 = scmp.lt.s32.totalorder %s20, 1
      %s272 = scalar_select %p271, %s20, 1
      %p273 = scmp.lt.s32.totalorder %s21, 0
      %s274 = scalar_select %p273, %s21, 0
      %s275 = sadd.s32 %s274, %s272
      %s276 = smul.addr %s275, 4
      %s277 = scalar_lea.vmem %s3, %s276
      %p278 = pneg %p131
      %p279 = pneg %p128
      %p280 = scmp.lt.s32.totalorder %s20, 1
      %s281 = scalar_select %p280, %s20, 1
      %p282 = scmp.lt.s32.totalorder %s21, 0
      %s283 = scalar_select %p282, %s21, 0
      %s284 = sadd.s32 %s283, %s281
      %s285 = scalar_lea.vmem %s4, %s284
      %p286 = pneg %p159
      %p287 = pneg %p156
      %p288 = pneg %p185
      %p289 = pneg %p182
      %p290 = scmp.lt.s32.totalorder %s20, 1
      %s291 = scalar_select %p290, %s20, 1
      %s292 = scalar_lea.vmem %s5, %s291
      %p293 = scmp.lt.s32.totalorder %s20, 1
      %s294 = scalar_select %p293, %s20, 1
      %s295 = scalar_lea.vmem %s0, %s294
      %p296 = scmp.lt.s32.totalorder %s20, 1
      %s297 = scalar_select %p296, %s20, 1
      %s298 = scalar_lea.vmem %s1, %s297
      %p299 = scmp.lt.s32.totalorder %s20, 1
      %s300 = scalar_select %p299, %s20, 1
      %p301 = scmp.lt.s32.totalorder %s21, 0
      %s302 = scalar_select %p301, %s21, 0
      %s303 = sadd.s32 %s302, %s300
      %s304 = smul.addr %s303, 4
      %s305 = scalar_lea.vmem %s2, %s304
      %p306 = scmp.lt.s32.totalorder %s20, 1
      %s307 = scalar_select %p306, %s20, 1
      %p308 = scmp.lt.s32.totalorder %s21, 0
      %s309 = scalar_select %p308, %s21, 0
      %s310 = sadd.s32 %s309, %s307
      %s311 = smul.addr %s310, 4
      %s312 = scalar_lea.vmem %s3, %s311
      %p313 = scmp.lt.s32.totalorder %s20, 1
      %s314 = scalar_select %p313, %s20, 1
      %p315 = scmp.lt.s32.totalorder %s21, 0
      %s316 = scalar_select %p315, %s21, 0
      %s317 = sadd.s32 %s316, %s314
      %s318 = scalar_lea.vmem %s4, %s317
      %p319 = scmp.lt.s32.totalorder %s20, 1
      %s320 = scalar_select %p319, %s20, 1
      %s321 = scalar_lea.vmem %s5, %s320
      %p322 = scmp.eq.s32.totalorder %s21, 0
      // Predicated region
      $region41: #{tpu_custom_call.1} parent=39 // pred_check
        %p323 = pneg %p322
      $region42: #{tpu_custom_call.1} parent=39 // pred_check_branch
        %325 = sbr.rel (%p323) target = $region44
      $region43: #{tpu_custom_call.1} parent=39 // pred_region
        %vm326 = vcmask 0
        %327 = vst.msk [vmem:[#allocation2] sm:$0x1] %vm326, 0.0
        %328 = vst.msk [vmem:[#allocation3] sm:$0x1] %vm326, 0.0
      $region44: #{tpu_custom_call.1} parent=39 // pred_fallthru
        _
      %v329 = vld [vmem:[%s305] sm:$0x7]
      %v330 = vld [vmem:[%s312] sm:$0x7]
      %v331 = vld [vmem:[%s318] sm:$0x1]
      %v332 = vunpack.c.l.bf16 %v331
      %v333 = vmul.f32 %v330, 0.55983585
      %v334 = vsub.f32 %v333, 0.07579619
      %v335 = vsub.f32 %v329, %v334
      %v336 = vand.u32 2147483647, %v335
      %v337 = vmul.f32 %v330, 0.55963266
      %v338 = vsub.f32 %v337, 0.0384897
      %v339 = vsub.f32 %v329, %v338
      %v340 = vand.u32 2147483647, %v339
      %v342 = vrot.slane %v340, 1
      %v344 = vadd.f32 %v336, %v342
      %v345 = vmul.f32 %v330, 1.2464011
      %v346 = vsub.f32 %v345, 0.10110011
      %v347 = vsub.f32 %v329, %v346
      %v348 = vand.u32 2147483647, %v347
      %v350 = vrot.slane %v348, 2
      %v352 = vadd.f32 %v344, %v350
      %v353 = vmul.f32 %v352, %v332
      %v354 = vld [vmem:[#allocation2] sm:$0x1]
      %vm355 = vcmask 57344
      %v356 = vsel %vm355, %v353, 0.0
      %357 = vadd.xlane.f32.xlu0 %v356
      %v358 = vpop.xlane.xlu0 %357
      %v359 = vadd.f32 %v354, %v358
      %vm360 = vcmask 0
      %361 = vst.msk [vmem:[#allocation2] sm:$0x1] %vm360, %v359
      %v362 = vld [vmem:[#allocation3] sm:$0x1]
      %v363 = vsel %vm355, %v332, 0.0
      %364 = vadd.xlane.f32.xlu0 %v363
      %v365 = vpop.xlane.xlu0 %364
      %v366 = vadd.f32 %v362, %v365
      %367 = vst.msk [vmem:[#allocation3] sm:$0x1] %vm360, %v366
      // Predicated region
      $region45: #{tpu_custom_call.1} parent=39 // pred_check
        %p368 = pneg %p322
      $region46: #{tpu_custom_call.1} parent=39 // pred_check_branch
        %370 = sbr.rel (%p368) target = $region48
      $region47: #{tpu_custom_call.1} parent=39 // pred_region
        %v371 = vld [vmem:[%s295] sm:$0x1]
        %v372 = vld [vmem:[%s298] sm:$0x1]
        %v373 = vsub.f32 %v372, -1.4729953
        %v374 = vmul.f32 %v373, 0.44037637
        %v375 = vsub.f32 %v371, %v374
        %v376 = vand.u32 2147483647, %v375
        %v377 = vld [vmem:[#allocation2] sm:$0x1]
        %v378 = vmul.f32 %v377, 0.29218334
        %v379 = vld [vmem:[#allocation3] sm:$0x1]
        %v380 = vrcp.pop %v379
        %v381 = vmul.f32 %v378, %v380
        %v382 = vadd.f32 %v376, %v381
        %383 = vst.msk [vmem:[%s321] sm:$0x1] %vm360, %v382
      $region48: #{tpu_custom_call.1} parent=39 // pred_fallthru
        _
      %p384 = scmp.lt.s32.totalorder %s20, 1
      %s385 = scalar_select %p384, %s20, 1
      %s386 = scalar_lea.vmem %s5, %s385
      // Predicated region
      $region49: #{tpu_custom_call.1} parent=39 // pred_check
        %p387 = pneg %p182
      $region50: #{tpu_custom_call.1} parent=39 // pred_check_branch
        %389 = sbr.rel (%p387) target = $region52
      $region51: #{tpu_custom_call.1} parent=39 // pred_region
        _
      $region52: #{tpu_custom_call.1} parent=39 // pred_fallthru
        _
    $region40: #{tpu_custom_call.1} parent=5 // pred_fallthru
      _
    %p390 = scmp.le.s32.totalorder 2, %s11
    // Predicated region
    $region53: #{tpu_custom_call.1} parent=5 // pred_check
      %p391 = pneg %p390
    $region54: #{tpu_custom_call.1} parent=5 // pred_check_branch
      %393 = sbr.rel (%p391) target = $region56
    $region55: #{tpu_custom_call.1} parent=5 // pred_region
      %s394 = ssub.s32 %s11, 2
      // Predicated region
      $region57: #{tpu_custom_call.1} parent=55 // pred_check
        %p395 = pneg %p188
      $region58: #{tpu_custom_call.1} parent=55 // pred_check_branch
        %397 = sbr.rel (%p395) target = $region60
      $region59: #{tpu_custom_call.1} parent=55 // pred_region
        %p398 = scmp.lt.s32.totalorder %s22, 1
        %s399 = scalar_select %p398, %s22, 1
        %s400 = scalar_lea.vmem %s5, %s399
      $region60: #{tpu_custom_call.1} parent=55 // pred_fallthru
        _
    $region56: #{tpu_custom_call.1} parent=5 // pred_fallthru
      _
  $region6: #{tpu_custom_call.1} parent=0 // loop_footer
    %s15 = sadd.s32 1, %s11
  $region7: #{tpu_custom_call.1} parent=0 // loop_footer_branch
    %10 = sbr.rel target = $region3
  $region8: #{tpu_custom_call.1} parent=0 // loop_exit
    _

</llo_original>
